<compile_context>
chip_gen: v7x
topology: tpu7x:2x2x1
jax: 0.10.0
libtpu: 0.0.40
codegen_flags: <defaults>
</compile_context>

<pallas_src>
import math

import numpy as np
import jax
import jax.numpy as jnp
from jax.experimental import pallas as pl
from jax.experimental.pallas import tpu as pltpu

BITS = 4
N_LEVELS = 2 ** BITS
HAD_BLOCK = 128


# --------------------------------------------------------------------------
# Constants: Lloyd-Max Gaussian codebook (matches the PyTorch buffer) and the
# 128x128 Sylvester Hadamard block scaled by 2^(-7/2).
# --------------------------------------------------------------------------
def _gaussian_lloyd_levels(n_levels):
    """Lloyd iteration on N(0,1); analytic integrals replace scipy.quad."""
    def pdf(v):
        return math.exp(-0.5 * v * v) / math.sqrt(2.0 * math.pi)

    def cdf(v):
        return 0.5 * (1.0 + math.erf(v / math.sqrt(2.0)))

    levels = np.linspace(-3.0, 3.0, n_levels)
    for _ in range(20):
        bnd = np.zeros(n_levels + 1)
        bnd[1:-1] = (levels[1:] + levels[:-1]) / 2.0
        bnd[0], bnd[-1] = -np.inf, np.inf
        new = []
        for i in range(n_levels):
            lo, hi = bnd[i], bnd[i + 1]
            p_lo = 0.0 if np.isinf(lo) else pdf(lo)
            p_hi = 0.0 if np.isinf(hi) else pdf(hi)
            c_lo = 0.0 if np.isinf(lo) else cdf(lo)
            c_hi = 1.0 if np.isinf(hi) else cdf(hi)
            num = p_lo - p_hi            # integral of x*phi(x) over [lo, hi]
            den = c_hi - c_lo            # integral of phi(x)   over [lo, hi]
            new.append(num / den if den > 1e-10 else levels[i])
        levels = np.array(new)
    # Enforce exact antisymmetry so the |.|+sign quantizer matches the full
    # codebook bit-for-bit on the level values.
    levels = (levels - levels[::-1]) * 0.5
    return levels.astype(np.float32)


LEVELS = _gaussian_lloyd_levels(N_LEVELS)                          # (16,) f32
MIDPOINTS = ((LEVELS[1:] + LEVELS[:-1]) * 0.5).astype(np.float32)  # (15,) f32
POS_LEVELS = LEVELS[N_LEVELS // 2:]                                # (8,) >= 0
POS_MIDS = ((POS_LEVELS[1:] + POS_LEVELS[:-1]) * 0.5).astype(np.float32)  # (7,)
_POS_LEVELS_PY = [float(v) for v in POS_LEVELS]
_POS_MID_PY = [float(v) for v in POS_MIDS]


def _hadamard_128():
    """Sylvester Hadamard H_128 scaled by 2^(-7/2) (orthonormal), float32."""
    H = np.array([[1.0]], dtype=np.float64)
    while H.shape[0] < HAD_BLOCK:
        H = np.block([[H, H], [H, -H]])
    return (H * (2.0 ** (-7 / 2))).astype(np.float32)


def _block_diag_hadamard(hidden):
    assert hidden % HAD_BLOCK == 0, "last dim must be a multiple of 128"
    nb = hidden // HAD_BLOCK
    return np.kron(np.eye(nb, dtype=np.float32), _hadamard_128())


# --------------------------------------------------------------------------
# Hardware-aware configuration (best effort; conservative fallback).
# --------------------------------------------------------------------------
def _tpu_generation():
    """Best-effort TPU generation from device_kind; 0 if unknown."""
    try:
        kind = jax.devices()[0].device_kind.lower()
    except Exception:
        return 0
    for g in (7, 6, 5, 4, 3, 2):
        if (f"v{g}" in kind) or (f"tpu{g}" in kind):
            return g
    return 0


def _hw_config():
    gen = _tpu_generation()
    if gen >= 7:
        # v7x: 64 MiB physical VMEM, 2 TensorCores per chip.
        return {"gen": gen, "max_block_bytes": 4 << 20,
                "vmem_limit": 48 << 20, "split_cores": True}
    if 4 <= gen <= 6:
        # v4/v5e/v6e: 128 MiB physical VMEM, 1 TensorCore.
        return {"gen": gen, "max_block_bytes": 8 << 20,
                "vmem_limit": 96 << 20, "split_cores": False}
    # Unknown / very old: stay inside the default scoped-VMEM limit.
    return {"gen": gen, "max_block_bytes": 2 << 20,
            "vmem_limit": None, "split_cores": False}


# --------------------------------------------------------------------------
# Kernel
# --------------------------------------------------------------------------
def _hhgcq_kernel(x_ref, h_ref, o_ref):
    """x_ref: (T, D) rows; h_ref: (CW, CW) Hadamard block-diag; o_ref: (T, D)."""
    T, D = x_ref.shape
    CW = h_ref.shape[0]                # 128 or 256 column chunk
    nb = D // CW
    h = h_ref[...]                     # already in the matmul compute dtype

    # --- std straight from x: the scaled Hadamard block is orthonormal, so
    # ||x_had||_2 == ||x||_2 per row.  Accumulated chunk-by-chunk so at most
    # one (T, CW) f32 temporary is live at a time (no spill-prone list).
    ss = jnp.zeros((T, 1), jnp.float32)
    for b in range(nb):
        xb = x_ref[:, b * CW:(b + 1) * CW].astype(jnp.float32)
        ss = ss + jnp.sum(xb * xb, axis=-1, keepdims=True)
    std = jnp.sqrt(ss * (1.0 / D)) + 1e-8                  # (T, 1) f32

    # Per-row decision thresholds mid_k * std: the per-element normalization
    # multiply (and the reciprocal) disappear -> 7 per-row muls instead.
    thr = [std * m for m in _POS_MID_PY]                   # 7 x (T, 1)

    # --- single fused pass per column chunk:
    #     Hadamard matmul -> symmetric nearest-level search -> store.
    # (mask / grad_flow cancel out of the forward value.)
    for b in range(nb):
        xb = x_ref[:, b * CW:(b + 1) * CW]
        if xb.dtype != h.dtype:
            xb = xb.astype(h.dtype)
        hb = jnp.dot(xb, h, preferred_element_type=jnp.float32)   # (T, CW) f32
        a = jnp.abs(hb)
        q = jnp.full_like(hb, _POS_LEVELS_PY[0])
        for lvl, t in zip(_POS_LEVELS_PY[1:], thr):        # 7 cmp + 7 sel
            q = jnp.where(a > t, lvl, q)
        qs = q * std                                       # back to x_had scale
        o_ref[:, b * CW:(b + 1) * CW] = jnp.where(hb < 0.0, -qs, qs).astype(o_ref.dtype)


# --------------------------------------------------------------------------
# Wrapper
# --------------------------------------------------------------------------
def _round_up(v, m):
    return (v + m - 1) // m * m


def half_hadamard_gaussian_clip_quantize(x, *, block_rows=None):
    """x: (..., D) with D a multiple of 128. Returns the same shape/dtype."""
    orig_shape = x.shape
    D = orig_shape[-1]
    assert D % HAD_BLOCK == 0, "last dim must be a multiple of 128"

    cfg = _hw_config()

    # bf16 inputs take the native bf16 MXU path (exact: H entries are
    # +-2^-3.5); everything else computes the matmul in f32.
    compute_dt = jnp.bfloat16 if x.dtype == jnp.bfloat16 else jnp.float32

    # 256-wide blockdiag(H128, H128) weight on v6e/v7x (2x256^2 MXU);
    # 128-wide on v5e/older/unknown (native 128^2 MXU tiles).
    cw = 2 * HAD_BLOCK if (cfg["gen"] >= 6 and D % (2 * HAD_BLOCK) == 0) else HAD_BLOCK
    h = jnp.asarray(
        np.kron(np.eye(cw // HAD_BLOCK, dtype=np.float32), _hadamard_128()),
        dtype=compute_dt)

    x2 = x.reshape(-1, D)              # leading-dim collapse: no HBM copy
    R = x2.shape[0]

    isize = jnp.dtype(x.dtype).itemsize
    sub = max(8, 32 // isize)          # sublane multiple for this dtype

    # Dtype-aware row tile from the per-generation byte budget.
    br_cap = max(sub, (cfg["max_block_bytes"] // (D * isize)) // sub * sub)
    br = min(br_cap, _round_up(R, sub))
    if block_rows is not None:
        br = min(br, max(sub, _round_up(block_rows, sub)))
    if cfg["split_cores"] and pl.cdiv(R, br) < 2 and R > sub:
        # Keep both v7x TensorCores fed (grid length >= 2).
        br = max(sub, _round_up(pl.cdiv(R, 2), sub))

    grid_rows = pl.cdiv(R, br)         # ragged tail handled by Pallas:
                                       # per-row math, OOB writes are masked.

    out = pl.pallas_call(
        _hhgcq_kernel,
        out_shape=jax.ShapeDtypeStruct((R, D), x.dtype),
        grid_spec=pltpu.PrefetchScalarGridSpec(
            num_scalar_prefetch=0,
            grid=(grid_rows,),
            in_specs=[
                pl.BlockSpec((br, D), lambda i: (i, 0)),
                pl.BlockSpec((cw, cw), lambda i: (0, 0)),
            ],
            out_specs=pl.BlockSpec((br, D), lambda i: (i, 0)),
        ),
        compiler_params=pltpu.CompilerParams(
            dimension_semantics=("parallel",),
            vmem_limit_bytes=cfg["vmem_limit"],
        ),
    )(x2, h)

    return out.reshape(orig_shape)


# --------------------------------------------------------------------------
# Pure-JAX reference mirroring the PyTorch forward, and test driver
# --------------------------------------------------------------------------
def _reference(x, matrix, levels):
    x_had = x @ matrix
    std = jnp.sqrt(jnp.mean(x_had ** 2, axis=-1, keepdims=True)) + 1e-8
    x_norm = x_had / std
    dist = jnp.abs(x_norm[..., None] - levels)
    idx = jnp.argmin(dist, axis=-1)
    xq = levels[idx] * std
    mask = (jnp.abs(x_norm) <= levels[-1]).astype(x.dtype)
    grad_flow = x_had * mask
    return grad_flow + (xq - grad_flow), x_norm


if __name__ == "__main__":
    B, S, D = 2, 8, 256  # D must be a multiple of 128
    key = jax.random.PRNGKey(0)
    x = jax.random.normal(key, (B, S, D), dtype=jnp.float32)

    y = half_hadamard_gaussian_clip_quantize(x)
    y = jax.block_until_ready(y)
    assert y.shape == x.shape and y.dtype == x.dtype

    matrix_full = jnp.asarray(_block_diag_hadamard(D))
    y_ref, xnorm_ref = _reference(x, matrix_full, jnp.asarray(LEVELS))

    # Elements essentially on a quantization decision boundary can land on the
    # adjacent level due to f32 op-order / std-from-||x|| rounding differences;
    # exclude that measure-zero set from the strict comparison.
    mids = jnp.asarray(MIDPOINTS)
    near = jnp.any(jnp.abs(xnorm_ref[..., None] - mids) < 3e-5, axis=-1)
    frac_near = float(jnp.mean(near.astype(jnp.float32)))
    assert frac_near < 0.01, f"too many boundary-adjacent elements: {frac_near}"
    ok = np.asarray(~near)

    np.testing.assert_allclose(np.asarray(y)[ok], np.asarray(y_ref)[ok],
                               rtol=1e-5, atol=1e-5)
    print("KERNEL_OK")
</pallas_src>

<mosaic_0001>
module attributes {stable_mosaic.version = 11 : i64} {
  func.func @_hhgcq_kernel(%arg0: i32, %arg1: memref<16x256xf32, #tpu.memory_space<vmem>>, %arg2: memref<128x128xf32, #tpu.memory_space<vmem>>, %arg3: memref<16x256xf32, #tpu.memory_space<vmem>>) attributes {dimension_semantics = [#tpu.dimension_semantics<parallel>], iteration_bounds = array<i64: 1>, scalar_prefetch = 0 : i64, scratch_operands = 0 : i64, tpu.core_type = #tpu.core_type<tc>, window_params = [{transform_indices = @transform_0, window_bounds = array<i64: 16, 256>}, {pipeline_mode = #tpu.pipeline_mode<synchronous>, transform_indices = @transform_1, window_bounds = array<i64: 128, 128>}, {transform_indices = @transform_2, window_bounds = array<i64: 16, 256>}]} {
    %c0 = arith.constant 0 : index
    %c0_0 = arith.constant 0 : index
    %0 = vector.load %arg2[%c0, %c0_0] : memref<128x128xf32, #tpu.memory_space<vmem>>, vector<128x128xf32>
    %cst = arith.constant 0.000000e+00 : f32
    %1 = vector.broadcast %cst : f32 to vector<16x1xf32>
    %c0_1 = arith.constant 0 : index
    %c0_2 = arith.constant 0 : index
    %2 = vector.load %arg1[%c0_1, %c0_2] : memref<16x256xf32, #tpu.memory_space<vmem>>, vector<16x128xf32>
    %3 = arith.mulf %2, %2 : vector<16x128xf32>
    %cst_3 = arith.constant dense<0.000000e+00> : vector<16xf32>
    %4 = vector.multi_reduction <add>, %3, %cst_3 [1] : vector<16x128xf32> to vector<16xf32>
    %5 = vector.shape_cast %4 : vector<16xf32> to vector<16x1xf32>
    %6 = arith.addf %1, %5 : vector<16x1xf32>
    %c0_4 = arith.constant 0 : index
    %c128 = arith.constant 128 : index
    %7 = vector.load %arg1[%c0_4, %c128] : memref<16x256xf32, #tpu.memory_space<vmem>>, vector<16x128xf32>
    %8 = arith.mulf %7, %7 : vector<16x128xf32>
    %cst_5 = arith.constant dense<0.000000e+00> : vector<16xf32>
    %9 = vector.multi_reduction <add>, %8, %cst_5 [1] : vector<16x128xf32> to vector<16xf32>
    %10 = vector.shape_cast %9 : vector<16xf32> to vector<16x1xf32>
    %11 = arith.addf %6, %10 : vector<16x1xf32>
    %cst_6 = arith.constant 3.906250e-03 : f32
    %12 = vector.broadcast %cst_6 : f32 to vector<16x1xf32>
    %13 = arith.mulf %11, %12 : vector<16x1xf32>
    %14 = math.sqrt %13 : vector<16x1xf32>
    %cst_7 = arith.constant 9.99999993E-9 : f32
    %15 = vector.broadcast %cst_7 : f32 to vector<16x1xf32>
    %16 = arith.addf %14, %15 : vector<16x1xf32>
    %cst_8 = arith.constant 0.324961722 : f32
    %17 = vector.broadcast %cst_8 : f32 to vector<16x1xf32>
    %18 = arith.mulf %16, %17 : vector<16x1xf32>
    %cst_9 = arith.constant 0.651883364 : f32
    %19 = vector.broadcast %cst_9 : f32 to vector<16x1xf32>
    %20 = arith.mulf %16, %19 : vector<16x1xf32>
    %cst_10 = arith.constant 0.983825087 : f32
    %21 = vector.broadcast %cst_10 : f32 to vector<16x1xf32>
    %22 = arith.mulf %16, %21 : vector<16x1xf32>
    %cst_11 = arith.constant 1.32661653 : f32
    %23 = vector.broadcast %cst_11 : f32 to vector<16x1xf32>
    %24 = arith.mulf %16, %23 : vector<16x1xf32>
    %cst_12 = arith.constant 1.69224644 : f32
    %25 = vector.broadcast %cst_12 : f32 to vector<16x1xf32>
    %26 = arith.mulf %16, %25 : vector<16x1xf32>
    %cst_13 = arith.constant 2.1078198 : f32
    %27 = vector.broadcast %cst_13 : f32 to vector<16x1xf32>
    %28 = arith.mulf %16, %27 : vector<16x1xf32>
    %cst_14 = arith.constant 2.65141606 : f32
    %29 = vector.broadcast %cst_14 : f32 to vector<16x1xf32>
    %30 = arith.mulf %16, %29 : vector<16x1xf32>
    %c0_15 = arith.constant 0 : index
    %c0_16 = arith.constant 0 : index
    %31 = vector.load %arg1[%c0_15, %c0_16] : memref<16x256xf32, #tpu.memory_space<vmem>>, vector<16x128xf32>
    %cst_17 = arith.constant dense<0.000000e+00> : vector<16x128xf32>
    %32 = tpu.matmul %31, %0, %cst_17 {dimension_numbers = #tpu.dot_dimension_numbers<[1], [0], [0], [1], [0, 0, 1, 1], [], []>} : vector<16x128xf32>, vector<128x128xf32>, vector<16x128xf32> -> vector<16x128xf32>
    %33 = math.absf %32 : vector<16x128xf32>
    %cst_18 = arith.constant 0.162266552 : f32
    %34 = vector.broadcast %cst_18 : f32 to vector<16x128xf32>
    %35 = vector.broadcast %18 : vector<16x1xf32> to vector<16x128xf32>
    %36 = arith.cmpf ogt, %33, %35 : vector<16x128xf32>
    %cst_19 = arith.constant 0.487656862 : f32
    %37 = vector.broadcast %cst_19 : f32 to vector<16x128xf32>
    %38 = arith.select %36, %37, %34 : vector<16x128xi1>, vector<16x128xf32>
    %39 = vector.broadcast %20 : vector<16x1xf32> to vector<16x128xf32>
    %40 = arith.cmpf ogt, %33, %39 : vector<16x128xf32>
    %cst_20 = arith.constant 0.816109836 : f32
    %41 = vector.broadcast %cst_20 : f32 to vector<16x128xf32>
    %42 = arith.select %40, %41, %38 : vector<16x128xi1>, vector<16x128xf32>
    %43 = vector.broadcast %22 : vector<16x1xf32> to vector<16x128xf32>
    %44 = arith.cmpf ogt, %33, %43 : vector<16x128xf32>
    %cst_21 = arith.constant 1.1515404 : f32
    %45 = vector.broadcast %cst_21 : f32 to vector<16x128xf32>
    %46 = arith.select %44, %45, %42 : vector<16x128xi1>, vector<16x128xf32>
    %47 = vector.broadcast %24 : vector<16x1xf32> to vector<16x128xf32>
    %48 = arith.cmpf ogt, %33, %47 : vector<16x128xf32>
    %cst_22 = arith.constant 1.50169277 : f32
    %49 = vector.broadcast %cst_22 : f32 to vector<16x128xf32>
    %50 = arith.select %48, %49, %46 : vector<16x128xi1>, vector<16x128xf32>
    %51 = vector.broadcast %26 : vector<16x1xf32> to vector<16x128xf32>
    %52 = arith.cmpf ogt, %33, %51 : vector<16x128xf32>
    %cst_23 = arith.constant 1.882800e+00 : f32
    %53 = vector.broadcast %cst_23 : f32 to vector<16x128xf32>
    %54 = arith.select %52, %53, %50 : vector<16x128xi1>, vector<16x128xf32>
    %55 = vector.broadcast %28 : vector<16x1xf32> to vector<16x128xf32>
    %56 = arith.cmpf ogt, %33, %55 : vector<16x128xf32>
    %cst_24 = arith.constant 2.33283949 : f32
    %57 = vector.broadcast %cst_24 : f32 to vector<16x128xf32>
    %58 = arith.select %56, %57, %54 : vector<16x128xi1>, vector<16x128xf32>
    %59 = vector.broadcast %30 : vector<16x1xf32> to vector<16x128xf32>
    %60 = arith.cmpf ogt, %33, %59 : vector<16x128xf32>
    %cst_25 = arith.constant 2.96999264 : f32
    %61 = vector.broadcast %cst_25 : f32 to vector<16x128xf32>
    %62 = arith.select %60, %61, %58 : vector<16x128xi1>, vector<16x128xf32>
    %63 = vector.broadcast %16 : vector<16x1xf32> to vector<16x128xf32>
    %64 = arith.mulf %62, %63 : vector<16x128xf32>
    %cst_26 = arith.constant 0.000000e+00 : f32
    %65 = vector.broadcast %cst_26 : f32 to vector<16x128xf32>
    %66 = arith.cmpf olt, %32, %65 : vector<16x128xf32>
    %cst_27 = arith.constant 0.000000e+00 : f32
    %67 = vector.broadcast %cst_27 : f32 to vector<16x128xf32>
    %68 = arith.subf %67, %64 : vector<16x128xf32>
    %69 = arith.select %66, %68, %64 : vector<16x128xi1>, vector<16x128xf32>
    %c0_28 = arith.constant 0 : index
    %c0_29 = arith.constant 0 : index
    %70 = vector.load %arg3[%c0_28, %c0_29] : memref<16x256xf32, #tpu.memory_space<vmem>>, vector<16x128xf32>
    tpu.vector_store %arg3[%c0_28, %c0_29], %69 {strides = array<i32>} : memref<16x256xf32, #tpu.memory_space<vmem>>, vector<16x128xf32>,
    %c0_30 = arith.constant 0 : index
    %c128_31 = arith.constant 128 : index
    %71 = vector.load %arg1[%c0_30, %c128_31] : memref<16x256xf32, #tpu.memory_space<vmem>>, vector<16x128xf32>
    %cst_32 = arith.constant dense<0.000000e+00> : vector<16x128xf32>
    %72 = tpu.matmul %71, %0, %cst_32 {dimension_numbers = #tpu.dot_dimension_numbers<[1], [0], [0], [1], [0, 0, 1, 1], [], []>} : vector<16x128xf32>, vector<128x128xf32>, vector<16x128xf32> -> vector<16x128xf32>
    %73 = math.absf %72 : vector<16x128xf32>
    %cst_33 = arith.constant 0.162266552 : f32
    %74 = vector.broadcast %cst_33 : f32 to vector<16x128xf32>
    %75 = vector.broadcast %18 : vector<16x1xf32> to vector<16x128xf32>
    %76 = arith.cmpf ogt, %73, %75 : vector<16x128xf32>
    %cst_34 = arith.constant 0.487656862 : f32
    %77 = vector.broadcast %cst_34 : f32 to vector<16x128xf32>
    %78 = arith.select %76, %77, %74 : vector<16x128xi1>, vector<16x128xf32>
    %79 = vector.broadcast %20 : vector<16x1xf32> to vector<16x128xf32>
    %80 = arith.cmpf ogt, %73, %79 : vector<16x128xf32>
    %cst_35 = arith.constant 0.816109836 : f32
    %81 = vector.broadcast %cst_35 : f32 to vector<16x128xf32>
    %82 = arith.select %80, %81, %78 : vector<16x128xi1>, vector<16x128xf32>
    %83 = vector.broadcast %22 : vector<16x1xf32> to vector<16x128xf32>
    %84 = arith.cmpf ogt, %73, %83 : vector<16x128xf32>
    %cst_36 = arith.constant 1.1515404 : f32
    %85 = vector.broadcast %cst_36 : f32 to vector<16x128xf32>
    %86 = arith.select %84, %85, %82 : vector<16x128xi1>, vector<16x128xf32>
    %87 = vector.broadcast %24 : vector<16x1xf32> to vector<16x128xf32>
    %88 = arith.cmpf ogt, %73, %87 : vector<16x128xf32>
    %cst_37 = arith.constant 1.50169277 : f32
    %89 = vector.broadcast %cst_37 : f32 to vector<16x128xf32>
    %90 = arith.select %88, %89, %86 : vector<16x128xi1>, vector<16x128xf32>
    %91 = vector.broadcast %26 : vector<16x1xf32> to vector<16x128xf32>
    %92 = arith.cmpf ogt, %73, %91 : vector<16x128xf32>
    %cst_38 = arith.constant 1.882800e+00 : f32
    %93 = vector.broadcast %cst_38 : f32 to vector<16x128xf32>
    %94 = arith.select %92, %93, %90 : vector<16x128xi1>, vector<16x128xf32>
    %95 = vector.broadcast %28 : vector<16x1xf32> to vector<16x128xf32>
    %96 = arith.cmpf ogt, %73, %95 : vector<16x128xf32>
    %cst_39 = arith.constant 2.33283949 : f32
    %97 = vector.broadcast %cst_39 : f32 to vector<16x128xf32>
    %98 = arith.select %96, %97, %94 : vector<16x128xi1>, vector<16x128xf32>
    %99 = vector.broadcast %30 : vector<16x1xf32> to vector<16x128xf32>
    %100 = arith.cmpf ogt, %73, %99 : vector<16x128xf32>
    %cst_40 = arith.constant 2.96999264 : f32
    %101 = vector.broadcast %cst_40 : f32 to vector<16x128xf32>
    %102 = arith.select %100, %101, %98 : vector<16x128xi1>, vector<16x128xf32>
    %103 = vector.broadcast %16 : vector<16x1xf32> to vector<16x128xf32>
    %104 = arith.mulf %102, %103 : vector<16x128xf32>
    %cst_41 = arith.constant 0.000000e+00 : f32
    %105 = vector.broadcast %cst_41 : f32 to vector<16x128xf32>
    %106 = arith.cmpf olt, %72, %105 : vector<16x128xf32>
    %cst_42 = arith.constant 0.000000e+00 : f32
    %107 = vector.broadcast %cst_42 : f32 to vector<16x128xf32>
    %108 = arith.subf %107, %104 : vector<16x128xf32>
    %109 = arith.select %106, %108, %104 : vector<16x128xi1>, vector<16x128xf32>
    %c0_43 = arith.constant 0 : index
    %c128_44 = arith.constant 128 : index
    %110 = vector.load %arg3[%c0_43, %c128_44] : memref<16x256xf32, #tpu.memory_space<vmem>>, vector<16x128xf32>
    tpu.vector_store %arg3[%c0_43, %c128_44], %109 {strides = array<i32>} : memref<16x256xf32, #tpu.memory_space<vmem>>, vector<16x128xf32>,
    return
  }
  func.func @transform_0(%arg0: i32) -> (i32, i32) {
    %c0_i32 = arith.constant 0 : i32
    %c0_i32_0 = arith.constant 0 : i32
    return %arg0, %c0_i32 : i32, i32
  }
  func.func @transform_1(%arg0: i32) -> (i32, i32) {
    %c0_i32 = arith.constant 0 : i32
    %c0_i32_0 = arith.constant 0 : i32
    %c0_i32_1 = arith.constant 0 : i32
    return %c0_i32, %c0_i32_0 : i32, i32
  }
  func.func @transform_2(%arg0: i32) -> (i32, i32) {
    %c0_i32 = arith.constant 0 : i32
    %c0_i32_0 = arith.constant 0 : i32
    return %arg0, %c0_i32 : i32, i32
  }
}

</mosaic_0001>

<llo_original>
// kernel: tpu_custom_call.1
$region0: #{tpu_custom_call.1}
  #allocation0 [shape = 'u32[]', space=smem, size = 0x4, offset = 0x4, fixed_abs, tag = 'smem constant byte address 0x4 - core index']
  #allocation1 [shape = 'u32[144,128]{1,0:T(1,128)}', space=vmem, size = 0x12000, scoped, tag = 'internal scratch']
  %s0 = inlined_call_operand.hbm [shape: f32[16,256], index: 0, kind: input, shape index: {}]
  %s1 = inlined_call_operand.hbm [shape: f32[128,128], index: 1, kind: input, shape index: {}]
  %s2 = inlined_call_operand.hbm [shape: f32[16,256], index: 2, kind: output, shape index: {}]
  %s3 = sld [smem:[#allocation0]]
  $region26: #{tpu_custom_call.1} parent=0
    _
  %s5 = ssub.s32 1, %s3
  %s6 = scalar_select 0, %s5, %s3
  $region1: #{tpu_custom_call.1} parent=0
    #allocation2 [shape = 'u8[16384]{0}', space=vmem, size = 0x4000, scoped, tag = 'input window, operand 0, single buffered']
    #allocation3 [shape = 's32[1]{0}', space=sflag, size = 0x4, scoped, tag = 'scoped memory for tpu_custom_call.1']
    #allocation4 [shape = 's32[1]{0}', space=sflag, size = 0x4, scoped, tag = 'scoped memory for tpu_custom_call.1']
    #allocation5 [shape = 'u8[65536]{0}', space=vmem, size = 0x10000, scoped, tag = 'input window, operand 1, single buffered']
    #allocation6 [shape = 's32[1]{0}', space=sflag, size = 0x4, scoped, tag = 'scoped memory for tpu_custom_call.1']
    #allocation7 [shape = 'u8[16384]{0}', space=vmem, size = 0x4000, scoped, tag = 'output window, operand 0, single buffered']
    %7 = vsyncpa [#allocation3], 0
    %8 = vsyncpa [#allocation6], 0
    %9 = vsyncpa [#allocation4], 0
    // Predicated region
    $region2: #{tpu_custom_call.1} parent=1 // pred_check
      _
    $region3: #{tpu_custom_call.1} parent=1 // pred_check_branch
      %11 = sbr.rel (0) target = $region5
    $region4: #{tpu_custom_call.1} parent=1 // pred_region
      %s13 = ssub.s32 512, 512
      %14 = vsyncadd [#allocation3], %s13
      %s15 = sshll.u32 [#allocation2], 4
      %s16 = int_to_ptr.vmem [resolvable:$true] %s15
      %21 = dma.hbm_to_vmem [thread:$0]  %s0, 512, %s16, [#allocation3], 256, 256, 16
    $region5: #{tpu_custom_call.1} parent=1 // pred_fallthru
      _
    // Predicated region
    $region6: #{tpu_custom_call.1} parent=1 // pred_check
      _
    $region7: #{tpu_custom_call.1} parent=1 // pred_check_branch
      %23 = sbr.rel (0) target = $region9
    $region8: #{tpu_custom_call.1} parent=1 // pred_region
      %s25 = ssub.s32 2048, 2048
      %26 = vsyncadd [#allocation6], %s25
      %s27 = sshll.u32 [#allocation5], 4
      %s28 = int_to_ptr.vmem [resolvable:$true] %s27
      %33 = dma.hbm_to_vmem [thread:$0]  %s1, 2048, %s28, [#allocation6], 128, 128, 8
    $region9: #{tpu_custom_call.1} parent=1 // pred_fallthru
      _
    // Predicated region
    $region10: #{tpu_custom_call.1} parent=1 // pred_check
      _
    $region11: #{tpu_custom_call.1} parent=1 // pred_check_branch
      %35 = sbr.rel (0) target = $region13
    $region12: #{tpu_custom_call.1} parent=1 // pred_region
      %36 = dma.done [#allocation3], 512
    $region13: #{tpu_custom_call.1} parent=1 // pred_fallthru
      _
    // Predicated region
    $region14: #{tpu_custom_call.1} parent=1 // pred_check
      _
    $region15: #{tpu_custom_call.1} parent=1 // pred_check_branch
      %38 = sbr.rel (0) target = $region17
    $region16: #{tpu_custom_call.1} parent=1 // pred_region
      %39 = dma.done [#allocation6], 2048
    $region17: #{tpu_custom_call.1} parent=1 // pred_fallthru
      _
    %v40 = vld [vmem:[#allocation5] sm:$0xff]
    %v41 = vld [vmem:[#allocation5 + $0x8] sm:$0xff]
    %v42 = vld [vmem:[#allocation5 + $0x10] sm:$0xff]
    %v43 = vld [vmem:[#allocation5 + $0x18] sm:$0xff]
    %v44 = vld [vmem:[#allocation5 + $0x20] sm:$0xff]
    %v45 = vld [vmem:[#allocation5 + $0x28] sm:$0xff]
    %v46 = vld [vmem:[#allocation5 + $0x30] sm:$0xff]
    %v47 = vld [vmem:[#allocation5 + $0x38] sm:$0xff]
    %v48 = vld [vmem:[#allocation5 + $0x40] sm:$0xff]
    %v49 = vld [vmem:[#allocation5 + $0x48] sm:$0xff]
    %v50 = vld [vmem:[#allocation5 + $0x50] sm:$0xff]
    %v51 = vld [vmem:[#allocation5 + $0x58] sm:$0xff]
    %v52 = vld [vmem:[#allocation5 + $0x60] sm:$0xff]
    %v53 = vld [vmem:[#allocation5 + $0x68] sm:$0xff]
    %v54 = vld [vmem:[#allocation5 + $0x70] sm:$0xff]
    %v55 = vld [vmem:[#allocation5 + $0x78] sm:$0xff]
    %v56 = vld [vmem:[#allocation2] sm:$0xff]
    %v57 = vld [vmem:[#allocation2 + $0x10] sm:$0xff]
    %v58 = vmul.f32 %v56, %v56
    %v59 = vmul.f32 %v57, %v57
    %60 = vadd.xlane.f32.xlu0 %v58
    %v61 = vpop.xlane.xlu0 %60
    %62 = vadd.xlane.f32.xlu0 %v59
    %v63 = vpop.xlane.xlu0 %62
    %v64 = vadd.f32 %v61, 0.0
    %v65 = vadd.f32 %v63, 0.0
    %v66 = vld [vmem:[#allocation2 + $0x8] sm:$0xff]
    %v67 = vld [vmem:[#allocation2 + $0x18] sm:$0xff]
    %v68 = vmul.f32 %v66, %v66
    %v69 = vmul.f32 %v67, %v67
    %70 = vadd.xlane.f32.xlu0 %v68
    %v71 = vpop.xlane.xlu0 %70
    %72 = vadd.xlane.f32.xlu0 %v69
    %v73 = vpop.xlane.xlu0 %72
    %v74 = vadd.f32 %v64, %v71
    %v75 = vadd.f32 %v65, %v73
    %v76 = vmul.f32 %v74, 0.00390625
    %v77 = vmul.f32 %v75, 0.00390625
    %v78 = vrsqrt.pop %v76
    %v79 = vmul.f32 %v76, %v78
    %vm80 = vcmp.eq.f32.partialorder %v76, inf
    %v81 = vsel %vm80, %v76, %v79
    %vm82 = vcmp.eq.f32.partialorder %v76, 0.0
    %v83 = vand.u32 %v76, 2147483648
    %v84 = vsel %vm82, %v83, %v81
    %v85 = vrsqrt.pop %v77
    %v86 = vmul.f32 %v77, %v85
    %vm87 = vcmp.eq.f32.partialorder %v77, inf
    %v88 = vsel %vm87, %v77, %v86
    %vm89 = vcmp.eq.f32.partialorder %v77, 0.0
    %v90 = vand.u32 %v77, 2147483648
    %v91 = vsel %vm89, %v90, %v88
    %v92 = vadd.f32 %v84, 1e-08
    %v93 = vadd.f32 %v91, 1e-08
    %v94 = vmul.f32 %v92, 0.32496172
    %v95 = vmul.f32 %v93, 0.32496172
    %v96 = vmul.f32 %v92, 0.65188336
    %v97 = vmul.f32 %v93, 0.65188336
    %v98 = vmul.f32 %v92, 0.9838251
    %v99 = vmul.f32 %v93, 0.9838251
    %v100 = vmul.f32 %v92, 1.3266165
    %v101 = vmul.f32 %v93, 1.3266165
    %v102 = vmul.f32 %v92, 1.6922464
    %v103 = vmul.f32 %v93, 1.6922464
    %v104 = vmul.f32 %v92, 2.1078198
    %v105 = vmul.f32 %v93, 2.1078198
    %v106 = vmul.f32 %v92, 2.651416
    %v107 = vmul.f32 %v93, 2.651416
    %108 = vmatprep.subr.mxu0 0.0
    %109 = vmatpush1.msra.mxu0 %v40
    %110 = vmatprep.subr.mxu0 0.0
    %111 = vmatpush1.msra.mxu0 %v41
    %112 = vmatprep.subr.mxu0 0.0
    %113 = vmatpush1.msra.mxu0 %v42
    %114 = vmatprep.subr.mxu0 0.0
    %115 = vmatpush1.msra.mxu0 %v43
    %116 = vmatprep.subr.mxu0 0.0
    %117 = vmatpush1.msra.mxu0 %v44
    %118 = vmatprep.subr.mxu0 0.0
    %119 = vmatpush1.msra.mxu0 %v45
    %120 = vmatprep.subr.mxu0 0.0
    %121 = vmatpush1.msra.mxu0 %v46
    %122 = vmatprep.subr.mxu0 0.0
    %123 = vmatpush1.msra.mxu0 %v47
    %124 = vmatprep.subr.mxu0 0.0
    %125 = vmatpush1.msra.mxu0 %v48
    %126 = vmatprep.subr.mxu0 0.0
    %127 = vmatpush1.msra.mxu0 %v49
    %128 = vmatprep.subr.mxu0 0.0
    %129 = vmatpush1.msra.mxu0 %v50
    %130 = vmatprep.subr.mxu0 0.0
    %131 = vmatpush1.msra.mxu0 %v51
    %132 = vmatprep.subr.mxu0 0.0
    %133 = vmatpush1.msra.mxu0 %v52
    %134 = vmatprep.subr.mxu0 0.0
    %135 = vmatpush1.msra.mxu0 %v53
    %136 = vmatprep.subr.mxu0 0.0
    %137 = vmatpush1.msra.mxu0 %v54
    %138 = vmatprep.subr.mxu0 0.0
    %139 = vmatpush1.msra.mxu0 %v55
    %140 = vmatprep.subr.mxu0 0.0
    %141 = vmatpush1.msra.mxu0 0.0
    %142 = vmatprep.subr.mxu0 0.0
    %143 = vmatpush1.msra.mxu0 0.0
    %144 = vmatprep.subr.mxu0 0.0
    %145 = vmatpush1.msra.mxu0 0.0
    %146 = vmatprep.subr.mxu0 0.0
    %147 = vmatpush1.msra.mxu0 0.0
    %148 = vmatprep.subr.mxu0 0.0
    %149 = vmatpush1.msra.mxu0 0.0
    %150 = vmatprep.subr.mxu0 0.0
    %151 = vmatpush1.msra.mxu0 0.0
    %152 = vmatprep.subr.mxu0 0.0
    %153 = vmatpush1.msra.mxu0 0.0
    %154 = vmatprep.subr.mxu0 0.0
    %155 = vmatpush1.msra.mxu0 0.0
    %156 = vmatprep.subr.mxu0 0.0
    %157 = vmatpush1.msra.mxu0 0.0
    %158 = vmatprep.subr.mxu0 0.0
    %159 = vmatpush1.msra.mxu0 0.0
    %160 = vmatprep.subr.mxu0 0.0
    %161 = vmatpush1.msra.mxu0 0.0
    %162 = vmatprep.subr.mxu0 0.0
    %163 = vmatpush1.msra.mxu0 0.0
    %164 = vmatprep.subr.mxu0 0.0
    %165 = vmatpush1.msra.mxu0 0.0
    %166 = vmatprep.subr.mxu0 0.0
    %167 = vmatpush1.msra.mxu0 0.0
    %168 = vmatprep.subr.mxu0 0.0
    %169 = vmatpush1.msra.mxu0 0.0
    %170 = vmatprep.subr.mxu0 0.0
    %171 = vmatpush1.msra.mxu0 0.0
    %172 = vmatprep.mubr.f32.mxu0 0.0
    %173 = vmatmul.mubr.f32.gmra.mrb[0].mxu0 %v56
    %v174 = vpop.f32.mrb[0].mxu0
    %v175 = vadd.f32 0.0, %v174
    %v176 = vpop.f32.mrb[0].mxu0
    %177 = vmatprep.mubr.f32.mxu0 0.0
    %178 = vmatmul.mubr.f32.gmra.mrb[0].mxu0 %v57
    %v179 = vpop.f32.mrb[0].mxu0
    %v180 = vadd.f32 0.0, %v179
    %v181 = vpop.f32.mrb[0].mxu0
    %182 = vdwg.mxu0
    %v183 = vand.u32 2147483647, %v175
    %v184 = vand.u32 2147483647, %v180
    %vm185 = vcmp.gt.f32.partialorder %v183, %v94
    %vm186 = vcmp.gt.f32.partialorder %v184, %v95
    %v187 = vsel %vm185, 0.48765686, 0.16226655
    %v188 = vsel %vm186, 0.48765686, 0.16226655
    %vm189 = vcmp.gt.f32.partialorder %v183, %v96
    %vm190 = vcmp.gt.f32.partialorder %v184, %v97
    %v191 = vsel %vm189, 0.81610984, %v187
    %v192 = vsel %vm190, 0.81610984, %v188
    %vm193 = vcmp.gt.f32.partialorder %v183, %v98
    %vm194 = vcmp.gt.f32.partialorder %v184, %v99
    %v195 = vsel %vm193, 1.1515404, %v191
    %v196 = vsel %vm194, 1.1515404, %v192
    %vm197 = vcmp.gt.f32.partialorder %v183, %v100
    %vm198 = vcmp.gt.f32.partialorder %v184, %v101
    %v199 = vsel %vm197, 1.5016928, %v195
    %v200 = vsel %vm198, 1.5016928, %v196
    %vm201 = vcmp.gt.f32.partialorder %v183, %v102
    %vm202 = vcmp.gt.f32.partialorder %v184, %v103
    %v203 = vsel %vm201, 1.8828, %v199
    %v204 = vsel %vm202, 1.8828, %v200
    %vm205 = vcmp.gt.f32.partialorder %v183, %v104
    %vm206 = vcmp.gt.f32.partialorder %v184, %v105
    %v207 = vsel %vm205, 2.3328395, %v203
    %v208 = vsel %vm206, 2.3328395, %v204
    %vm209 = vcmp.gt.f32.partialorder %v183, %v106
    %vm210 = vcmp.gt.f32.partialorder %v184, %v107
    %v211 = vsel %vm209, 2.9699926, %v207
    %v212 = vsel %vm210, 2.9699926, %v208
    %v213 = vmul.f32 %v211, %v92
    %v214 = vmul.f32 %v212, %v93
    %vm215 = vcmp.lt.f32.partialorder %v175, 0.0
    %vm216 = vcmp.lt.f32.partialorder %v180, 0.0
    %v217 = vsub.f32 0.0, %v213
    %v218 = vsub.f32 0.0, %v214
    %v219 = vsel %vm215, %v217, %v213
    %v220 = vsel %vm216, %v218, %v214
    %221 = vst [vmem:[#allocation7] sm:$0xff] %v219
    %222 = vst [vmem:[#allocation7 + $0x10] sm:$0xff] %v220
    %v223 = vld [vmem:[#allocation2 + $0x8] sm:$0xff]
    %v224 = vld [vmem:[#allocation2 + $0x18] sm:$0xff]
    %225 = vmatprep.subr.mxu0 0.0
    %226 = vmatpush1.msra.mxu0 %v40
    %227 = vmatprep.subr.mxu0 0.0
    %228 = vmatpush1.msra.mxu0 %v41
    %229 = vmatprep.subr.mxu0 0.0
    %230 = vmatpush1.msra.mxu0 %v42
    %231 = vmatprep.subr.mxu0 0.0
    %232 = vmatpush1.msra.mxu0 %v43
    %233 = vmatprep.subr.mxu0 0.0
    %234 = vmatpush1.msra.mxu0 %v44
    %235 = vmatprep.subr.mxu0 0.0
    %236 = vmatpush1.msra.mxu0 %v45
    %237 = vmatprep.subr.mxu0 0.0
    %238 = vmatpush1.msra.mxu0 %v46
    %239 = vmatprep.subr.mxu0 0.0
    %240 = vmatpush1.msra.mxu0 %v47
    %241 = vmatprep.subr.mxu0 0.0
    %242 = vmatpush1.msra.mxu0 %v48
    %243 = vmatprep.subr.mxu0 0.0
    %244 = vmatpush1.msra.mxu0 %v49
    %245 = vmatprep.subr.mxu0 0.0
    %246 = vmatpush1.msra.mxu0 %v50
    %247 = vmatprep.subr.mxu0 0.0
    %248 = vmatpush1.msra.mxu0 %v51
    %249 = vmatprep.subr.mxu0 0.0
    %250 = vmatpush1.msra.mxu0 %v52
    %251 = vmatprep.subr.mxu0 0.0
    %252 = vmatpush1.msra.mxu0 %v53
    %253 = vmatprep.subr.mxu0 0.0
    %254 = vmatpush1.msra.mxu0 %v54
    %255 = vmatprep.subr.mxu0 0.0
    %256 = vmatpush1.msra.mxu0 %v55
    %257 = vmatprep.subr.mxu0 0.0
    %258 = vmatpush1.msra.mxu0 0.0
    %259 = vmatprep.subr.mxu0 0.0
    %260 = vmatpush1.msra.mxu0 0.0
    %261 = vmatprep.subr.mxu0 0.0
    %262 = vmatpush1.msra.mxu0 0.0
    %263 = vmatprep.subr.mxu0 0.0
    %264 = vmatpush1.msra.mxu0 0.0
    %265 = vmatprep.subr.mxu0 0.0
    %266 = vmatpush1.msra.mxu0 0.0
    %267 = vmatprep.subr.mxu0 0.0
    %268 = vmatpush1.msra.mxu0 0.0
    %269 = vmatprep.subr.mxu0 0.0
    %270 = vmatpush1.msra.mxu0 0.0
    %271 = vmatprep.subr.mxu0 0.0
    %272 = vmatpush1.msra.mxu0 0.0
    %273 = vmatprep.subr.mxu0 0.0
    %274 = vmatpush1.msra.mxu0 0.0
    %275 = vmatprep.subr.mxu0 0.0
    %276 = vmatpush1.msra.mxu0 0.0
    %277 = vmatprep.subr.mxu0 0.0
    %278 = vmatpush1.msra.mxu0 0.0
    %279 = vmatprep.subr.mxu0 0.0
    %280 = vmatpush1.msra.mxu0 0.0
    %281 = vmatprep.subr.mxu0 0.0
    %282 = vmatpush1.msra.mxu0 0.0
    %283 = vmatprep.subr.mxu0 0.0
    %284 = vmatpush1.msra.mxu0 0.0
    %285 = vmatprep.subr.mxu0 0.0
    %286 = vmatpush1.msra.mxu0 0.0
    %287 = vmatprep.subr.mxu0 0.0
    %288 = vmatpush1.msra.mxu0 0.0
    %289 = vmatprep.mubr.f32.mxu0 0.0
    %290 = vmatmul.mubr.f32.gmra.mrb[0].mxu0 %v223
    %v291 = vpop.f32.mrb[0].mxu0
    %v292 = vadd.f32 0.0, %v291
    %v293 = vpop.f32.mrb[0].mxu0
    %294 = vmatprep.mubr.f32.mxu0 0.0
    %295 = vmatmul.mubr.f32.gmra.mrb[0].mxu0 %v224
    %v296 = vpop.f32.mrb[0].mxu0
    %v297 = vadd.f32 0.0, %v296
    %v298 = vpop.f32.mrb[0].mxu0
    %299 = vdwg.mxu0
    %v300 = vand.u32 2147483647, %v292
    %v301 = vand.u32 2147483647, %v297
    %vm302 = vcmp.gt.f32.partialorder %v300, %v94
    %vm303 = vcmp.gt.f32.partialorder %v301, %v95
    %v304 = vsel %vm302, 0.48765686, 0.16226655
    %v305 = vsel %vm303, 0.48765686, 0.16226655
    %vm306 = vcmp.gt.f32.partialorder %v300, %v96
    %vm307 = vcmp.gt.f32.partialorder %v301, %v97
    %v308 = vsel %vm306, 0.81610984, %v304
    %v309 = vsel %vm307, 0.81610984, %v305
    %vm310 = vcmp.gt.f32.partialorder %v300, %v98
    %vm311 = vcmp.gt.f32.partialorder %v301, %v99
    %v312 = vsel %vm310, 1.1515404, %v308
    %v313 = vsel %vm311, 1.1515404, %v309
    %vm314 = vcmp.gt.f32.partialorder %v300, %v100
    %vm315 = vcmp.gt.f32.partialorder %v301, %v101
    %v316 = vsel %vm314, 1.5016928, %v312
    %v317 = vsel %vm315, 1.5016928, %v313
    %vm318 = vcmp.gt.f32.partialorder %v300, %v102
    %vm319 = vcmp.gt.f32.partialorder %v301, %v103
    %v320 = vsel %vm318, 1.8828, %v316
    %v321 = vsel %vm319, 1.8828, %v317
    %vm322 = vcmp.gt.f32.partialorder %v300, %v104
    %vm323 = vcmp.gt.f32.partialorder %v301, %v105
    %v324 = vsel %vm322, 2.3328395, %v320
    %v325 = vsel %vm323, 2.3328395, %v321
    %vm326 = vcmp.gt.f32.partialorder %v300, %v106
    %vm327 = vcmp.gt.f32.partialorder %v301, %v107
    %v328 = vsel %vm326, 2.9699926, %v324
    %v329 = vsel %vm327, 2.9699926, %v325
    %v330 = vmul.f32 %v328, %v92
    %v331 = vmul.f32 %v329, %v93
    %vm332 = vcmp.lt.f32.partialorder %v292, 0.0
    %vm333 = vcmp.lt.f32.partialorder %v297, 0.0
    %v334 = vsub.f32 0.0, %v330
    %v335 = vsub.f32 0.0, %v331
    %v336 = vsel %vm332, %v334, %v330
    %v337 = vsel %vm333, %v335, %v331
    %338 = vst [vmem:[#allocation7 + $0x8] sm:$0xff] %v336
    %339 = vst [vmem:[#allocation7 + $0x18] sm:$0xff] %v337
    // Predicated region
    $region18: #{tpu_custom_call.1} parent=1 // pred_check
      _
    $region19: #{tpu_custom_call.1} parent=1 // pred_check_branch
      %341 = sbr.rel (0) target = $region21
    $region20: #{tpu_custom_call.1} parent=1 // pred_region
      %s343 = ssub.s32 512, 512
      %344 = vsyncadd [#allocation4], %s343
      %s345 = sshll.u32 [#allocation7], 4
      %s346 = int_to_ptr.vmem [resolvable:$true] %s345
      %351 = dma.vmem_to_hbm [thread:$0]  %s346, 512, %s2, [#allocation4], 256, 256, 16
    $region21: #{tpu_custom_call.1} parent=1 // pred_fallthru
      _
    // Predicated region
    $region22: #{tpu_custom_call.1} parent=1 // pred_check
      _
    $region23: #{tpu_custom_call.1} parent=1 // pred_check_branch
      %353 = sbr.rel (0) target = $region25
    $region24: #{tpu_custom_call.1} parent=1 // pred_region
      %354 = dma.done [#allocation4], 512
    $region25: #{tpu_custom_call.1} parent=1 // pred_fallthru
      _
    %355 = vsyncpa [#allocation3], 1
    %356 = vsyncpa [#allocation6], 1
    %357 = vsyncpa [#allocation4], 1

</llo_original>
